<compile_context>
chip_gen: v7x
topology: tpu7x:2x2x1
jax: 0.10.0
libtpu: 0.0.40
codegen_flags: <defaults>
</compile_context>

<pallas_src>
import jax
import jax.numpy as jnp
from jax.experimental import pallas as pl
from jax.experimental.pallas import tpu as pltpu


def _round_up(x, m):
    return ((x + m - 1) // m) * m


def lstm_step_fc_kernel(emb_ref, h_ref, c_ref,
                        w_cat_ref, b_ref,
                        w_fc_ref, b_fc_ref,
                        logits_ref, h_out_ref, c_out_ref):
    """One fused LSTM cell step + output projection, all resident in VMEM."""
    H = h_ref.shape[-1]

    h = h_ref[...]                      # (B, H)  f32 state
    c = c_ref[...]                      # (B, H)  f32 state

    # Fused gate pre-activation: a single MXU matmul over K = E + H.
    #   gates = [emb, h] @ [w_ih; w_hh] + (b_ih + b_hh)   -> (B, 4H) f32
    xh = jnp.concatenate([emb_ref[...], h.astype(w_cat_ref.dtype)], axis=-1)
    gates = (jnp.dot(xh, w_cat_ref[...],
                     preferred_element_type=jnp.float32)
             + b_ref[...])

    # PyTorch LSTM gate ordering along 4H: input, forget, cell(g), output.
    # H is a multiple of 128 -> each slice is a lane-aligned zero-cost view.
    i_g = jax.nn.sigmoid(gates[:, 0 * H:1 * H])
    f_g = jax.nn.sigmoid(gates[:, 1 * H:2 * H])
    g_g = jnp.tanh(gates[:, 2 * H:3 * H])
    o_g = jax.nn.sigmoid(gates[:, 3 * H:4 * H])

    c_new = f_g * c + i_g * g_g
    h_new = o_g * jnp.tanh(c_new)

    c_out_ref[...] = c_new
    h_out_ref[...] = h_new

    # fc: (B, H) @ (H, V_pad) + b_fc -> (B, V_pad); V_pad % 128 == 0 so the
    # logits store is lane-dense (padded columns are zero, sliced off outside).
    logits_ref[...] = (jnp.dot(h_new.astype(w_fc_ref.dtype), w_fc_ref[...],
                               preferred_element_type=jnp.float32)
                       + b_fc_ref[...])


@jax.jit
def rnn_forward(params, x, hidden, cell):
    """Mirrors RNN.forward: returns (logits (B,V), hidden (1,B,H), cell (1,B,H))."""
    # Embedding lookup (gather) — plain-JAX glue, bf16 table.
    emb = jnp.take(params["embedding"], x, axis=0)   # (B, E) bf16

    h0 = hidden[0]                                   # (B, H) f32
    c0 = cell[0]                                     # (B, H) f32

    B, H = h0.shape
    V = params["embedding"].shape[0]                 # true vocab size (static)
    Vp = params["w_fc"].shape[-1]                    # padded vocab (mult of 128)

    vmem = pl.BlockSpec(memory_space=pltpu.MemorySpace.VMEM)

    logits_p, h1, c1 = pl.pallas_call(
        lstm_step_fc_kernel,
        out_shape=(
            jax.ShapeDtypeStruct((B, Vp), jnp.float32),
            jax.ShapeDtypeStruct((B, H), jnp.float32),
            jax.ShapeDtypeStruct((B, H), jnp.float32),
        ),
        in_specs=[vmem] * 7,
        out_specs=(vmem, vmem, vmem),
        # Reuse the h/c input buffers for the updated state (no fresh alloc).
        input_output_aliases={1: 1, 2: 2},
    )(emb, h0, c0,
      params["w_cat"], params["b"],
      params["w_fc"], params["b_fc"])

    # out.reshape(B, -1) with seq_len == 1 -> (B, V); drop vocab padding.
    logits = logits_p[:, :V]
    return logits, h1[None, :, :], c1[None, :, :]


def init_params(key, vocab_size, embed_dim, hidden_size):
    """Deterministic synthetic parameters matching the module's shapes.

    Weight layout is pre-arranged for the kernel:
      * w_cat = [w_ih; w_hh] transposed to (E + H, 4H), bf16
      * w_fc  transposed to (H, V_pad), bf16, vocab axis zero-padded to 128k
      * biases kept in f32, (1, 4H) and (1, V_pad)
    """
    ks = jax.random.split(key, 7)
    scale = 1.0 / jnp.sqrt(jnp.float32(hidden_size))
    v_pad = _round_up(vocab_size, 128)

    emb = jax.random.normal(ks[0], (vocab_size, embed_dim), jnp.float32)
    w_ih = jax.random.uniform(ks[1], (embed_dim, 4 * hidden_size),
                              jnp.float32, -scale, scale)
    w_hh = jax.random.uniform(ks[2], (hidden_size, 4 * hidden_size),
                              jnp.float32, -scale, scale)
    b = (jax.random.uniform(ks[3], (1, 4 * hidden_size),
                            jnp.float32, -scale, scale)
         + jax.random.uniform(ks[4], (1, 4 * hidden_size),
                              jnp.float32, -scale, scale))
    w_fc = jax.random.uniform(ks[5], (hidden_size, vocab_size),
                              jnp.float32, -scale, scale)
    b_fc = jax.random.uniform(ks[6], (1, vocab_size),
                              jnp.float32, -scale, scale)

    # Fused gate weight, bf16 for HBM bandwidth + bf16 MXU.
    w_cat = jnp.concatenate([w_ih, w_hh], axis=0).astype(jnp.bfloat16)

    # Pad the vocab axis to a multiple of 128 (zero columns -> exact slice).
    w_fc_p = (jnp.zeros((hidden_size, v_pad), jnp.float32)
              .at[:, :vocab_size].set(w_fc).astype(jnp.bfloat16))
    b_fc_p = jnp.zeros((1, v_pad), jnp.float32).at[:, :vocab_size].set(b_fc)

    return {
        "embedding": emb.astype(jnp.bfloat16),   # (V, E)   bf16
        "w_cat": w_cat,                          # (E+H,4H) bf16
        "b": b,                                  # (1, 4H)  f32
        "w_fc": w_fc_p,                          # (H, Vp)  bf16
        "b_fc": b_fc_p,                          # (1, Vp)  f32
    }


if __name__ == "__main__":
    # Small shapes consistent with the module (original: B=64, E=256, H=512).
    # H and E chosen as multiples of 128 so gate slices / concat are
    # lane-aligned, B=8 fills the sublanes.
    batch_size = 8
    vocab_size = 48
    embed_dim = 128
    rnn_hidden_size = 128

    key = jax.random.PRNGKey(0)
    pkey, xkey = jax.random.split(key)

    params = init_params(pkey, vocab_size, embed_dim, rnn_hidden_size)

    x = jax.random.randint(xkey, (batch_size,), 0, vocab_size, jnp.int32)
    # init_hidden(batch_size)
    hidden = jnp.zeros((1, batch_size, rnn_hidden_size), jnp.float32)
    cell = jnp.zeros((1, batch_size, rnn_hidden_size), jnp.float32)

    logits, h1, c1 = rnn_forward(params, x, hidden, cell)
    jax.block_until_ready((logits, h1, c1))

    assert logits.shape == (batch_size, vocab_size)
    assert h1.shape == (1, batch_size, rnn_hidden_size)
    assert c1.shape == (1, batch_size, rnn_hidden_size)
    assert bool(jnp.all(jnp.isfinite(logits)))

    print("KERNEL_OK")
</pallas_src>

<mosaic_0001>
module attributes {stable_mosaic.version = 11 : i64} {
  func.func @lstm_step_fc_kernel(%arg0: memref<8x128xbf16, #tpu.memory_space<vmem>>, %arg1: memref<8x128xf32, #tpu.memory_space<vmem>>, %arg2: memref<8x128xf32, #tpu.memory_space<vmem>>, %arg3: memref<256x512xbf16, #tpu.memory_space<vmem>>, %arg4: memref<1x512xf32, #tpu.memory_space<vmem>>, %arg5: memref<128x128xbf16, #tpu.memory_space<vmem>>, %arg6: memref<1x128xf32, #tpu.memory_space<vmem>>, %arg7: memref<8x128xf32, #tpu.memory_space<vmem>>, %arg8: memref<8x128xf32, #tpu.memory_space<vmem>>, %arg9: memref<8x128xf32, #tpu.memory_space<vmem>>) attributes {dimension_semantics = [], scalar_prefetch = 0 : i64, scratch_operands = 0 : i64, tpu.core_type = #tpu.core_type<tc>} {
    %c0 = arith.constant 0 : index
    %c0_0 = arith.constant 0 : index
    %0 = vector.load %arg1[%c0, %c0_0] : memref<8x128xf32, #tpu.memory_space<vmem>>, vector<8x128xf32>
    %c0_1 = arith.constant 0 : index
    %c0_2 = arith.constant 0 : index
    %1 = vector.load %arg2[%c0_1, %c0_2] : memref<8x128xf32, #tpu.memory_space<vmem>>, vector<8x128xf32>
    %c0_3 = arith.constant 0 : index
    %c0_4 = arith.constant 0 : index
    %2 = vector.load %arg0[%c0_3, %c0_4] : memref<8x128xbf16, #tpu.memory_space<vmem>>, vector<8x128xbf16>
    %3 = arith.truncf %0 : vector<8x128xf32> to vector<8x128xbf16>
    %4 = tpu.concatenate %2, %3 in 1 : vector<8x128xbf16>, vector<8x128xbf16> -> vector<8x256xbf16>
    %c0_5 = arith.constant 0 : index
    %c0_6 = arith.constant 0 : index
    %5 = vector.load %arg3[%c0_5, %c0_6] : memref<256x512xbf16, #tpu.memory_space<vmem>>, vector<256x512xbf16>
    %cst = arith.constant dense<0.000000e+00> : vector<8x512xf32>
    %6 = tpu.matmul %4, %5, %cst {dimension_numbers = #tpu.dot_dimension_numbers<[1], [0], [0], [1], [0, 0, 1, 1], [], []>} : vector<8x256xbf16>, vector<256x512xbf16>, vector<8x512xf32> -> vector<8x512xf32>
    %c0_7 = arith.constant 0 : index
    %c0_8 = arith.constant 0 : index
    %7 = vector.load %arg4[%c0_7, %c0_8] : memref<1x512xf32, #tpu.memory_space<vmem>>, vector<1x512xf32>
    %8 = vector.broadcast %7 : vector<1x512xf32> to vector<8x512xf32>
    %9 = arith.addf %6, %8 : vector<8x512xf32>
    %10 = vector.extract_strided_slice %9 {offsets = [0, 0], sizes = [8, 128], strides = [1, 1]} : vector<8x512xf32> to vector<8x128xf32>
    %11 = arith.negf %10 : vector<8x128xf32>
    %12 = math.exp %11 : vector<8x128xf32>
    %cst_9 = arith.constant 1.000000e+00 : f32
    %13 = vector.broadcast %cst_9 : f32 to vector<8x128xf32>
    %14 = arith.addf %13, %12 : vector<8x128xf32>
    %15 = arith.divf %13, %14 : vector<8x128xf32>
    %16 = vector.extract_strided_slice %9 {offsets = [0, 128], sizes = [8, 128], strides = [1, 1]} : vector<8x512xf32> to vector<8x128xf32>
    %17 = arith.negf %16 : vector<8x128xf32>
    %18 = math.exp %17 : vector<8x128xf32>
    %cst_10 = arith.constant 1.000000e+00 : f32
    %19 = vector.broadcast %cst_10 : f32 to vector<8x128xf32>
    %20 = arith.addf %19, %18 : vector<8x128xf32>
    %21 = arith.divf %19, %20 : vector<8x128xf32>
    %22 = vector.extract_strided_slice %9 {offsets = [0, 256], sizes = [8, 128], strides = [1, 1]} : vector<8x512xf32> to vector<8x128xf32>
    %23 = math.tanh %22 : vector<8x128xf32>
    %24 = vector.extract_strided_slice %9 {offsets = [0, 384], sizes = [8, 128], strides = [1, 1]} : vector<8x512xf32> to vector<8x128xf32>
    %25 = arith.negf %24 : vector<8x128xf32>
    %26 = math.exp %25 : vector<8x128xf32>
    %cst_11 = arith.constant 1.000000e+00 : f32
    %27 = vector.broadcast %cst_11 : f32 to vector<8x128xf32>
    %28 = arith.addf %27, %26 : vector<8x128xf32>
    %29 = arith.divf %27, %28 : vector<8x128xf32>
    %30 = arith.mulf %21, %1 : vector<8x128xf32>
    %31 = arith.mulf %15, %23 : vector<8x128xf32>
    %32 = arith.addf %30, %31 : vector<8x128xf32>
    %33 = math.tanh %32 : vector<8x128xf32>
    %34 = arith.mulf %29, %33 : vector<8x128xf32>
    %c0_12 = arith.constant 0 : index
    %c0_13 = arith.constant 0 : index
    %35 = vector.load %arg9[%c0_12, %c0_13] : memref<8x128xf32, #tpu.memory_space<vmem>>, vector<8x128xf32>
    tpu.vector_store %arg9[%c0_12, %c0_13], %32 {strides = array<i32>} : memref<8x128xf32, #tpu.memory_space<vmem>>, vector<8x128xf32>,
    %c0_14 = arith.constant 0 : index
    %c0_15 = arith.constant 0 : index
    %36 = vector.load %arg8[%c0_14, %c0_15] : memref<8x128xf32, #tpu.memory_space<vmem>>, vector<8x128xf32>
    tpu.vector_store %arg8[%c0_14, %c0_15], %34 {strides = array<i32>} : memref<8x128xf32, #tpu.memory_space<vmem>>, vector<8x128xf32>,
    %37 = arith.truncf %34 : vector<8x128xf32> to vector<8x128xbf16>
    %c0_16 = arith.constant 0 : index
    %c0_17 = arith.constant 0 : index
    %38 = vector.load %arg5[%c0_16, %c0_17] : memref<128x128xbf16, #tpu.memory_space<vmem>>, vector<128x128xbf16>
    %cst_18 = arith.constant dense<0.000000e+00> : vector<8x128xf32>
    %39 = tpu.matmul %37, %38, %cst_18 {dimension_numbers = #tpu.dot_dimension_numbers<[1], [0], [0], [1], [0, 0, 1, 1], [], []>} : vector<8x128xbf16>, vector<128x128xbf16>, vector<8x128xf32> -> vector<8x128xf32>
    %c0_19 = arith.constant 0 : index
    %c0_20 = arith.constant 0 : index
    %40 = vector.load %arg6[%c0_19, %c0_20] : memref<1x128xf32, #tpu.memory_space<vmem>>, vector<1x128xf32>
    %41 = vector.broadcast %40 : vector<1x128xf32> to vector<8x128xf32>
    %42 = arith.addf %39, %41 : vector<8x128xf32>
    %c0_21 = arith.constant 0 : index
    %c0_22 = arith.constant 0 : index
    %43 = vector.load %arg7[%c0_21, %c0_22] : memref<8x128xf32, #tpu.memory_space<vmem>>, vector<8x128xf32>
    tpu.vector_store %arg7[%c0_21, %c0_22], %42 {strides = array<i32>} : memref<8x128xf32, #tpu.memory_space<vmem>>, vector<8x128xf32>,
    return
  }
}

</mosaic_0001>

<llo_original>
// kernel: rnn_forward.1
$region0: #{rnn_forward.1}
  #allocation0 [shape = 'u32[]', space=smem, size = 0x4, offset = 0x4, fixed_abs, tag = 'smem constant byte address 0x4 - core index']
  #allocation1 [shape = 'u32[144,128]{1,0:T(1,128)}', space=vmem, size = 0x12000, scoped, tag = 'internal scratch']
  %s0 = inlined_call_operand.vmem [shape: bf16[8,128], index: 0, kind: input, shape index: {}]
  %s1 = inlined_call_operand.vmem [shape: f32[8,128], index: 1, kind: input, shape index: {}, may-alias: {1,8}]
  %s2 = inlined_call_operand.vmem [shape: f32[8,128], index: 2, kind: input, shape index: {}, may-alias: {2,9}]
  %s3 = inlined_call_operand.hbm [shape: bf16[256,512], index: 3, kind: input, shape index: {}]
  %s4 = inlined_call_operand.vmem [shape: f32[1,512], index: 4, kind: input, shape index: {}]
  %s5 = inlined_call_operand.vmem [shape: bf16[128,128], index: 5, kind: input, shape index: {}]
  %s6 = inlined_call_operand.vmem [shape: f32[1,128], index: 6, kind: input, shape index: {}]
  %s7 = inlined_call_operand.hbm [shape: f32[8,128], index: 7, kind: output, shape index: {0}]
  %s8 = inlined_call_operand.vmem [shape: f32[8,128], index: 8, kind: output, shape index: {1}, may-alias: {1,8}]
  %s9 = inlined_call_operand.vmem [shape: f32[8,128], index: 9, kind: output, shape index: {2}, may-alias: {2,9}]
  %10 = xla_tuple %s7, %s8, %s9
  %s11 = sld [smem:[#allocation0]]
  $region58: #{rnn_forward.1} parent=0
    _
  %s13 = ssub.s32 1, %s11
  %s14 = scalar_select 0, %s13, %s11
  $region1: #{rnn_forward.1} parent=0
    #allocation2 [shape = 'u8[262144]{0}', space=vmem, size = 0x40000, scoped, tag = 'input window, operand 3, single buffered']
    #allocation3 [shape = 's32[1]{0}', space=sflag, size = 0x4, scoped, tag = 'scoped memory for rnn_forward.1']
    #allocation4 [shape = 's32[1]{0}', space=sflag, size = 0x4, scoped, tag = 'scoped memory for rnn_forward.1']
    #allocation5 [shape = 'u8[4096]{0}', space=vmem, size = 0x1000, scoped, tag = 'output window, operand 0, single buffered']
    %15 = vsyncpa [#allocation3], 0
    %16 = vsyncpa [#allocation4], 0
    // Predicated region
    $region2: #{rnn_forward.1} parent=1 // pred_check
      _
    $region3: #{rnn_forward.1} parent=1 // pred_check_branch
      %18 = sbr.rel (0) target = $region5
    $region4: #{rnn_forward.1} parent=1 // pred_region
      _
    $region5: #{rnn_forward.1} parent=1 // pred_fallthru
      _
    // Predicated region
    $region6: #{rnn_forward.1} parent=1 // pred_check
      _
    $region7: #{rnn_forward.1} parent=1 // pred_check_branch
      %20 = sbr.rel (0) target = $region9
    $region8: #{rnn_forward.1} parent=1 // pred_region
      _
    $region9: #{rnn_forward.1} parent=1 // pred_fallthru
      _
    // Predicated region
    $region10: #{rnn_forward.1} parent=1 // pred_check
      _
    $region11: #{rnn_forward.1} parent=1 // pred_check_branch
      %22 = sbr.rel (0) target = $region13
    $region12: #{rnn_forward.1} parent=1 // pred_region
      _
    $region13: #{rnn_forward.1} parent=1 // pred_fallthru
      _
    // Predicated region
    $region14: #{rnn_forward.1} parent=1 // pred_check
      _
    $region15: #{rnn_forward.1} parent=1 // pred_check_branch
      %24 = sbr.rel (0) target = $region17
    $region16: #{rnn_forward.1} parent=1 // pred_region
      %s26 = ssub.s32 8192, 8192
      %27 = vsyncadd [#allocation3], %s26
      %s28 = sshll.u32 [#allocation2], 4
      %s29 = int_to_ptr.vmem [resolvable:$true] %s28
      %34 = dma.hbm_to_vmem [thread:$0]  %s3, 8192, %s29, [#allocation3], 256, 256, 16
    $region17: #{rnn_forward.1} parent=1 // pred_fallthru
      _
    // Predicated region
    $region18: #{rnn_forward.1} parent=1 // pred_check
      _
    $region19: #{rnn_forward.1} parent=1 // pred_check_branch
      %36 = sbr.rel (0) target = $region21
    $region20: #{rnn_forward.1} parent=1 // pred_region
      _
    $region21: #{rnn_forward.1} parent=1 // pred_fallthru
      _
    // Predicated region
    $region22: #{rnn_forward.1} parent=1 // pred_check
      _
    $region23: #{rnn_forward.1} parent=1 // pred_check_branch
      %38 = sbr.rel (0) target = $region25
    $region24: #{rnn_forward.1} parent=1 // pred_region
      _
    $region25: #{rnn_forward.1} parent=1 // pred_fallthru
      _
    // Predicated region
    $region26: #{rnn_forward.1} parent=1 // pred_check
      _
    $region27: #{rnn_forward.1} parent=1 // pred_check_branch
      %40 = sbr.rel (0) target = $region29
    $region28: #{rnn_forward.1} parent=1 // pred_region
      _
    $region29: #{rnn_forward.1} parent=1 // pred_fallthru
      _
    // Predicated region
    $region30: #{rnn_forward.1} parent=1 // pred_check
      _
    $region31: #{rnn_forward.1} parent=1 // pred_check_branch
      %42 = sbr.rel (0) target = $region33
    $region32: #{rnn_forward.1} parent=1 // pred_region
      %43 = dma.done [#allocation3], 8192
    $region33: #{rnn_forward.1} parent=1 // pred_fallthru
      _
    %v45 = vld [vmem:[%s1] sm:$0xff]
    %v46 = vld [vmem:[%s2] sm:$0xff]
    %v47 = vld [vmem:[%s0] sm:$0xf]
    %v48 = vpack.c.bf16 %v45, %v45
    %v49 = vld [vmem:[#allocation2] sm:$0xff]
    %v50 = vld [vmem:[#allocation2 + $0x8] sm:$0xff]
    %v51 = vld [vmem:[#allocation2 + $0x10] sm:$0xff]
    %v52 = vld [vmem:[#allocation2 + $0x18] sm:$0xff]
    %v53 = vld [vmem:[#allocation2 + $0x20] sm:$0xff]
    %v54 = vld [vmem:[#allocation2 + $0x28] sm:$0xff]
    %v55 = vld [vmem:[#allocation2 + $0x30] sm:$0xff]
    %v56 = vld [vmem:[#allocation2 + $0x38] sm:$0xff]
    %v57 = vld [vmem:[#allocation2 + $0x40] sm:$0xff]
    %v58 = vld [vmem:[#allocation2 + $0x48] sm:$0xff]
    %v59 = vld [vmem:[#allocation2 + $0x50] sm:$0xff]
    %v60 = vld [vmem:[#allocation2 + $0x58] sm:$0xff]
    %v61 = vld [vmem:[#allocation2 + $0x60] sm:$0xff]
    %v62 = vld [vmem:[#allocation2 + $0x68] sm:$0xff]
    %v63 = vld [vmem:[#allocation2 + $0x70] sm:$0xff]
    %v64 = vld [vmem:[#allocation2 + $0x78] sm:$0xff]
    %v65 = vld [vmem:[#allocation2 + $0x80] sm:$0xff]
    %v66 = vld [vmem:[#allocation2 + $0x88] sm:$0xff]
    %v67 = vld [vmem:[#allocation2 + $0x90] sm:$0xff]
    %v68 = vld [vmem:[#allocation2 + $0x98] sm:$0xff]
    %v69 = vld [vmem:[#allocation2 + $0xa0] sm:$0xff]
    %v70 = vld [vmem:[#allocation2 + $0xa8] sm:$0xff]
    %v71 = vld [vmem:[#allocation2 + $0xb0] sm:$0xff]
    %v72 = vld [vmem:[#allocation2 + $0xb8] sm:$0xff]
    %v73 = vld [vmem:[#allocation2 + $0xc0] sm:$0xff]
    %v74 = vld [vmem:[#allocation2 + $0xc8] sm:$0xff]
    %v75 = vld [vmem:[#allocation2 + $0xd0] sm:$0xff]
    %v76 = vld [vmem:[#allocation2 + $0xd8] sm:$0xff]
    %v77 = vld [vmem:[#allocation2 + $0xe0] sm:$0xff]
    %v78 = vld [vmem:[#allocation2 + $0xe8] sm:$0xff]
    %v79 = vld [vmem:[#allocation2 + $0xf0] sm:$0xff]
    %v80 = vld [vmem:[#allocation2 + $0xf8] sm:$0xff]
    %v81 = vld [vmem:[#allocation2 + $0x100] sm:$0xff]
    %v82 = vld [vmem:[#allocation2 + $0x108] sm:$0xff]
    %v83 = vld [vmem:[#allocation2 + $0x110] sm:$0xff]
    %v84 = vld [vmem:[#allocation2 + $0x118] sm:$0xff]
    %v85 = vld [vmem:[#allocation2 + $0x120] sm:$0xff]
    %v86 = vld [vmem:[#allocation2 + $0x128] sm:$0xff]
    %v87 = vld [vmem:[#allocation2 + $0x130] sm:$0xff]
    %v88 = vld [vmem:[#allocation2 + $0x138] sm:$0xff]
    %v89 = vld [vmem:[#allocation2 + $0x140] sm:$0xff]
    %v90 = vld [vmem:[#allocation2 + $0x148] sm:$0xff]
    %v91 = vld [vmem:[#allocation2 + $0x150] sm:$0xff]
    %v92 = vld [vmem:[#allocation2 + $0x158] sm:$0xff]
    %v93 = vld [vmem:[#allocation2 + $0x160] sm:$0xff]
    %v94 = vld [vmem:[#allocation2 + $0x168] sm:$0xff]
    %v95 = vld [vmem:[#allocation2 + $0x170] sm:$0xff]
    %v96 = vld [vmem:[#allocation2 + $0x178] sm:$0xff]
    %v97 = vld [vmem:[#allocation2 + $0x180] sm:$0xff]
    %v98 = vld [vmem:[#allocation2 + $0x188] sm:$0xff]
    %v99 = vld [vmem:[#allocation2 + $0x190] sm:$0xff]
    %v100 = vld [vmem:[#allocation2 + $0x198] sm:$0xff]
    %v101 = vld [vmem:[#allocation2 + $0x1a0] sm:$0xff]
    %v102 = vld [vmem:[#allocation2 + $0x1a8] sm:$0xff]
    %v103 = vld [vmem:[#allocation2 + $0x1b0] sm:$0xff]
    %v104 = vld [vmem:[#allocation2 + $0x1b8] sm:$0xff]
    %v105 = vld [vmem:[#allocation2 + $0x1c0] sm:$0xff]
    %v106 = vld [vmem:[#allocation2 + $0x1c8] sm:$0xff]
    %v107 = vld [vmem:[#allocation2 + $0x1d0] sm:$0xff]
    %v108 = vld [vmem:[#allocation2 + $0x1d8] sm:$0xff]
    %v109 = vld [vmem:[#allocation2 + $0x1e0] sm:$0xff]
    %v110 = vld [vmem:[#allocation2 + $0x1e8] sm:$0xff]
    %v111 = vld [vmem:[#allocation2 + $0x1f0] sm:$0xff]
    %v112 = vld [vmem:[#allocation2 + $0x1f8] sm:$0xff]
    %v113 = vld [vmem:[%s4] sm:$0xf]
    %v115 = vlaneseq
    %v116 = vshrl.u32 %v115, 7
    %v117 = vsub.s32 0, %v116
    %v118 = vrot.slane %v113, %v117
    %v119 = vlaneseq
    %v120 = vshrl.u32 %v119, 7
    %v121 = vsub.s32 1, %v120
    %v122 = vrot.slane %v113, %v121
    %v123 = vlaneseq
    %v124 = vshrl.u32 %v123, 7
    %v125 = vsub.s32 2, %v124
    %v126 = vrot.slane %v113, %v125
    %v127 = vlaneseq
    %v128 = vshrl.u32 %v127, 7
    %v129 = vsub.s32 3, %v128
    %v130 = vrot.slane %v113, %v129
    %v199 = vunpack.c.l.b16 %v49
    %v200 = vunpack.c.h.b16 %v49
    %v201 = vunpack.c.l.b16 %v50
    %v202 = vunpack.c.h.b16 %v50
    %v203 = vunpack.c.l.b16 %v51
    %v204 = vunpack.c.h.b16 %v51
    %v205 = vunpack.c.l.b16 %v52
    %v206 = vunpack.c.h.b16 %v52
    %v207 = vunpack.c.l.b16 %v53
    %v208 = vunpack.c.h.b16 %v53
    %v209 = vunpack.c.l.b16 %v54
    %v210 = vunpack.c.h.b16 %v54
    %v211 = vunpack.c.l.b16 %v55
    %v212 = vunpack.c.h.b16 %v55
    %v213 = vunpack.c.l.b16 %v56
    %v214 = vunpack.c.h.b16 %v56
    %v215 = vunpack.c.l.b16 %v57
    %v216 = vunpack.c.h.b16 %v57
    %v217 = vunpack.c.l.b16 %v58
    %v218 = vunpack.c.h.b16 %v58
    %v219 = vunpack.c.l.b16 %v59
    %v220 = vunpack.c.h.b16 %v59
    %v221 = vunpack.c.l.b16 %v60
    %v222 = vunpack.c.h.b16 %v60
    %v223 = vunpack.c.l.b16 %v61
    %v224 = vunpack.c.h.b16 %v61
    %v225 = vunpack.c.l.b16 %v62
    %v226 = vunpack.c.h.b16 %v62
    %v227 = vunpack.c.l.b16 %v63
    %v228 = vunpack.c.h.b16 %v63
    %v229 = vunpack.c.l.b16 %v64
    %v230 = vunpack.c.h.b16 %v64
    %v231 = vunpack.c.l.b16 %v65
    %v232 = vunpack.c.h.b16 %v65
    %v233 = vunpack.c.l.b16 %v66
    %v234 = vunpack.c.h.b16 %v66
    %v235 = vunpack.c.l.b16 %v67
    %v236 = vunpack.c.h.b16 %v67
    %v237 = vunpack.c.l.b16 %v68
    %v238 = vunpack.c.h.b16 %v68
    %v239 = vunpack.c.l.b16 %v69
    %v240 = vunpack.c.h.b16 %v69
    %v241 = vunpack.c.l.b16 %v70
    %v242 = vunpack.c.h.b16 %v70
    %v243 = vunpack.c.l.b16 %v71
    %v244 = vunpack.c.h.b16 %v71
    %v245 = vunpack.c.l.b16 %v72
    %v246 = vunpack.c.h.b16 %v72
    %v247 = vunpack.c.l.b16 %v73
    %v248 = vunpack.c.h.b16 %v73
    %v249 = vunpack.c.l.b16 %v74
    %v250 = vunpack.c.h.b16 %v74
    %v251 = vunpack.c.l.b16 %v75
    %v252 = vunpack.c.h.b16 %v75
    %v253 = vunpack.c.l.b16 %v76
    %v254 = vunpack.c.h.b16 %v76
    %v255 = vunpack.c.l.b16 %v77
    %v256 = vunpack.c.h.b16 %v77
    %v257 = vunpack.c.l.b16 %v78
    %v258 = vunpack.c.h.b16 %v78
    %v259 = vunpack.c.l.b16 %v79
    %v260 = vunpack.c.h.b16 %v79
    %v261 = vunpack.c.l.b16 %v80
    %v262 = vunpack.c.h.b16 %v80
    %v263 = vunpack.c.l.b16 %v81
    %v264 = vunpack.c.h.b16 %v81
    %v265 = vunpack.c.l.b16 %v82
    %v266 = vunpack.c.h.b16 %v82
    %v267 = vunpack.c.l.b16 %v83
    %v268 = vunpack.c.h.b16 %v83
    %v269 = vunpack.c.l.b16 %v84
    %v270 = vunpack.c.h.b16 %v84
    %v271 = vunpack.c.l.b16 %v85
    %v272 = vunpack.c.h.b16 %v85
    %v273 = vunpack.c.l.b16 %v86
    %v274 = vunpack.c.h.b16 %v86
    %v275 = vunpack.c.l.b16 %v87
    %v276 = vunpack.c.h.b16 %v87
    %v277 = vunpack.c.l.b16 %v88
    %v278 = vunpack.c.h.b16 %v88
    %v279 = vunpack.c.l.b16 %v89
    %v280 = vunpack.c.h.b16 %v89
    %v281 = vunpack.c.l.b16 %v90
    %v282 = vunpack.c.h.b16 %v90
    %v283 = vunpack.c.l.b16 %v91
    %v284 = vunpack.c.h.b16 %v91
    %v285 = vunpack.c.l.b16 %v92
    %v286 = vunpack.c.h.b16 %v92
    %v287 = vunpack.c.l.b16 %v93
    %v288 = vunpack.c.h.b16 %v93
    %v289 = vunpack.c.l.b16 %v94
    %v290 = vunpack.c.h.b16 %v94
    %v291 = vunpack.c.l.b16 %v95
    %v292 = vunpack.c.h.b16 %v95
    %v293 = vunpack.c.l.b16 %v96
    %v294 = vunpack.c.h.b16 %v96
    %v295 = vunpack.c.l.b16 %v97
    %v296 = vunpack.c.h.b16 %v97
    %v297 = vunpack.c.l.b16 %v98
    %v298 = vunpack.c.h.b16 %v98
    %v299 = vunpack.c.l.b16 %v99
    %v300 = vunpack.c.h.b16 %v99
    %v301 = vunpack.c.l.b16 %v100
    %v302 = vunpack.c.h.b16 %v100
    %v303 = vunpack.c.l.b16 %v101
    %v304 = vunpack.c.h.b16 %v101
    %v305 = vunpack.c.l.b16 %v102
    %v306 = vunpack.c.h.b16 %v102
    %v307 = vunpack.c.l.b16 %v103
    %v308 = vunpack.c.h.b16 %v103
    %v309 = vunpack.c.l.b16 %v104
    %v310 = vunpack.c.h.b16 %v104
    %v311 = vunpack.c.l.b16 %v105
    %v312 = vunpack.c.h.b16 %v105
    %v313 = vunpack.c.l.b16 %v106
    %v314 = vunpack.c.h.b16 %v106
    %v315 = vunpack.c.l.b16 %v107
    %v316 = vunpack.c.h.b16 %v107
    %v317 = vunpack.c.l.b16 %v108
    %v318 = vunpack.c.h.b16 %v108
    %v319 = vunpack.c.l.b16 %v109
    %v320 = vunpack.c.h.b16 %v109
    %v321 = vunpack.c.l.b16 %v110
    %v322 = vunpack.c.h.b16 %v110
    %v323 = vunpack.c.l.b16 %v111
    %v324 = vunpack.c.h.b16 %v111
    %v325 = vunpack.c.l.b16 %v112
    %v326 = vunpack.c.h.b16 %v112
    %v327 = vpack.c.b16 %v203, %v199
    %v328 = vpack.c.b16 %v204, %v200
    %v329 = vpack.c.b16 %v205, %v201
    %v330 = vpack.c.b16 %v206, %v202
    %v331 = vpack.c.b16 %v211, %v207
    %v332 = vpack.c.b16 %v212, %v208
    %v333 = vpack.c.b16 %v213, %v209
    %v334 = vpack.c.b16 %v214, %v210
    %v335 = vpack.c.b16 %v219, %v215
    %v336 = vpack.c.b16 %v220, %v216
    %v337 = vpack.c.b16 %v221, %v217
    %v338 = vpack.c.b16 %v222, %v218
    %v339 = vpack.c.b16 %v227, %v223
    %v340 = vpack.c.b16 %v228, %v224
    %v341 = vpack.c.b16 %v229, %v225
    %v342 = vpack.c.b16 %v230, %v226
    %v343 = vpack.c.b16 %v235, %v231
    %v344 = vpack.c.b16 %v236, %v232
    %v345 = vpack.c.b16 %v237, %v233
    %v346 = vpack.c.b16 %v238, %v234
    %v347 = vpack.c.b16 %v243, %v239
    %v348 = vpack.c.b16 %v244, %v240
    %v349 = vpack.c.b16 %v245, %v241
    %v350 = vpack.c.b16 %v246, %v242
    %v351 = vpack.c.b16 %v251, %v247
    %v352 = vpack.c.b16 %v252, %v248
    %v353 = vpack.c.b16 %v253, %v249
    %v354 = vpack.c.b16 %v254, %v250
    %v355 = vpack.c.b16 %v259, %v255
    %v356 = vpack.c.b16 %v260, %v256
    %v357 = vpack.c.b16 %v261, %v257
    %v358 = vpack.c.b16 %v262, %v258
    %v359 = vpack.c.b16 %v267, %v263
    %v360 = vpack.c.b16 %v268, %v264
    %v361 = vpack.c.b16 %v269, %v265
    %v362 = vpack.c.b16 %v270, %v266
    %v363 = vpack.c.b16 %v275, %v271
    %v364 = vpack.c.b16 %v276, %v272
    %v365 = vpack.c.b16 %v277, %v273
    %v366 = vpack.c.b16 %v278, %v274
    %v367 = vpack.c.b16 %v283, %v279
    %v368 = vpack.c.b16 %v284, %v280
    %v369 = vpack.c.b16 %v285, %v281
    %v370 = vpack.c.b16 %v286, %v282
    %v371 = vpack.c.b16 %v291, %v287
    %v372 = vpack.c.b16 %v292, %v288
    %v373 = vpack.c.b16 %v293, %v289
    %v374 = vpack.c.b16 %v294, %v290
    %v375 = vpack.c.b16 %v299, %v295
    %v376 = vpack.c.b16 %v300, %v296
    %v377 = vpack.c.b16 %v301, %v297
    %v378 = vpack.c.b16 %v302, %v298
    %v379 = vpack.c.b16 %v307, %v303
    %v380 = vpack.c.b16 %v308, %v304
    %v381 = vpack.c.b16 %v309, %v305
    %v382 = vpack.c.b16 %v310, %v306
    %v383 = vpack.c.b16 %v315, %v311
    %v384 = vpack.c.b16 %v316, %v312
    %v385 = vpack.c.b16 %v317, %v313
    %v386 = vpack.c.b16 %v318, %v314
    %v387 = vpack.c.b16 %v323, %v319
    %v388 = vpack.c.b16 %v324, %v320
    %v389 = vpack.c.b16 %v325, %v321
    %v390 = vpack.c.b16 %v326, %v322
    %455 = vmatprep.subr.bf16.mxu0 %v328
    %456 = vmatpush1.bf16.msra.mxu0 %v327
    %457 = vmatprep.subr.bf16.mxu0 %v332
    %458 = vmatpush1.bf16.msra.mxu0 %v331
    %459 = vmatprep.subr.bf16.mxu0 %v336
    %460 = vmatpush1.bf16.msra.mxu0 %v335
    %461 = vmatprep.subr.bf16.mxu0 %v340
    %462 = vmatpush1.bf16.msra.mxu0 %v339
    %463 = vmatprep.subr.bf16.mxu0 %v344
    %464 = vmatpush1.bf16.msra.mxu0 %v343
    %465 = vmatprep.subr.bf16.mxu0 %v348
    %466 = vmatpush1.bf16.msra.mxu0 %v347
    %467 = vmatprep.subr.bf16.mxu0 %v352
    %468 = vmatpush1.bf16.msra.mxu0 %v351
    %469 = vmatprep.subr.bf16.mxu0 %v356
    %470 = vmatpush1.bf16.msra.mxu0 %v355
    %471 = vmatprep.subr.bf16.mxu0 %v360
    %472 = vmatpush1.bf16.msra.mxu0 %v359
    %473 = vmatprep.subr.bf16.mxu0 %v364
    %474 = vmatpush1.bf16.msra.mxu0 %v363
    %475 = vmatprep.subr.bf16.mxu0 %v368
    %476 = vmatpush1.bf16.msra.mxu0 %v367
    %477 = vmatprep.subr.bf16.mxu0 %v372
    %478 = vmatpush1.bf16.msra.mxu0 %v371
    %479 = vmatprep.subr.bf16.mxu0 %v376
    %480 = vmatpush1.bf16.msra.mxu0 %v375
    %481 = vmatprep.subr.bf16.mxu0 %v380
    %482 = vmatpush1.bf16.msra.mxu0 %v379
    %483 = vmatprep.subr.bf16.mxu0 %v384
    %484 = vmatpush1.bf16.msra.mxu0 %v383
    %485 = vmatprep.subr.bf16.mxu0 %v388
    %486 = vmatpush1.bf16.msra.mxu0 %v387
    %487 = vmatprep.mubr.bf16.mxu0 %v48
    %488 = vmatmul.mubr.bf16.gmra.mrb[0].mxu0 %v47
    %v489 = vpop.f32.mrb[0].mxu0
    %v490 = vadd.f32 %v118, %v489
    %v491 = vpop.f32.mrb[0].mxu0
    %v492 = vadd.f32 %v122, %v491
    %v493 = vpop.f32.mrb[0].mxu0
    %v494 = vpop.f32.mrb[0].mxu0
    %495 = vdwg.mxu0
    %496 = vmatprep.subr.bf16.mxu0 %v330
    %497 = vmatpush1.bf16.msra.mxu0 %v329
    %498 = vmatprep.subr.bf16.mxu0 %v334
    %499 = vmatpush1.bf16.msra.mxu0 %v333
    %500 = vmatprep.subr.bf16.mxu0 %v338
    %501 = vmatpush1.bf16.msra.mxu0 %v337
    %502 = vmatprep.subr.bf16.mxu0 %v342
    %503 = vmatpush1.bf16.msra.mxu0 %v341
    %504 = vmatprep.subr.bf16.mxu0 %v346
    %505 = vmatpush1.bf16.msra.mxu0 %v345
    %506 = vmatprep.subr.bf16.mxu0 %v350
    %507 = vmatpush1.bf16.msra.mxu0 %v349
    %508 = vmatprep.subr.bf16.mxu0 %v354
    %509 = vmatpush1.bf16.msra.mxu0 %v353
    %510 = vmatprep.subr.bf16.mxu0 %v358
    %511 = vmatpush1.bf16.msra.mxu0 %v357
    %512 = vmatprep.subr.bf16.mxu0 %v362
    %513 = vmatpush1.bf16.msra.mxu0 %v361
    %514 = vmatprep.subr.bf16.mxu0 %v366
    %515 = vmatpush1.bf16.msra.mxu0 %v365
    %516 = vmatprep.subr.bf16.mxu0 %v370
    %517 = vmatpush1.bf16.msra.mxu0 %v369
    %518 = vmatprep.subr.bf16.mxu0 %v374
    %519 = vmatpush1.bf16.msra.mxu0 %v373
    %520 = vmatprep.subr.bf16.mxu0 %v378
    %521 = vmatpush1.bf16.msra.mxu0 %v377
    %522 = vmatprep.subr.bf16.mxu0 %v382
    %523 = vmatpush1.bf16.msra.mxu0 %v381
    %524 = vmatprep.subr.bf16.mxu0 %v386
    %525 = vmatpush1.bf16.msra.mxu0 %v385
    %526 = vmatprep.subr.bf16.mxu0 %v390
    %527 = vmatpush1.bf16.msra.mxu0 %v389
    %528 = vmatprep.mubr.bf16.mxu0 %v48
    %529 = vmatmul.mubr.bf16.gmra.mrb[0].mxu0 %v47
    %v530 = vpop.f32.mrb[0].mxu0
    %v531 = vadd.f32 %v126, %v530
    %v532 = vpop.f32.mrb[0].mxu0
    %v533 = vadd.f32 %v130, %v532
    %v534 = vpop.f32.mrb[0].mxu0
    %v535 = vpop.f32.mrb[0].mxu0
    %536 = vdwg.mxu0
    %v537 = vxor.u32 %v490, 2147483648
    %v538 = vmul.f32 %v537, 1.442695
    %v539 = vpow.pop %v538
    %v540 = vadd.f32 %v539, 1.0
    %v541 = vrcp.pop %v540
    %v542 = vmul.f32 1.0, %v541
    %v543 = vxor.u32 %v492, 2147483648
    %v544 = vmul.f32 %v543, 1.442695
    %v545 = vpow.pop %v544
    %v546 = vadd.f32 %v545, 1.0
    %v547 = vrcp.pop %v546
    %v548 = vmul.f32 1.0, %v547
    %v549 = vtanh.pop %v531
    %v550 = vxor.u32 %v533, 2147483648
    %v551 = vmul.f32 %v550, 1.442695
    %v552 = vpow.pop %v551
    %v553 = vadd.f32 %v552, 1.0
    %v554 = vrcp.pop %v553
    %v555 = vmul.f32 1.0, %v554
    %v556 = vmul.f32 %v548, %v46
    %v557 = vmul.f32 %v542, %v549
    %v558 = vadd.f32 %v556, %v557
    %v559 = vtanh.pop %v558
    %v560 = vmul.f32 %v555, %v559
    %561 = vst [vmem:[%s9] sm:$0xff] %v558
    %562 = vst [vmem:[%s8] sm:$0xff] %v560
    %v563 = vpack.c.bf16 %v560, %v560
    %v564 = vld [vmem:[%s5] sm:$0xf]
    %v565 = vld [vmem:[%s5 + $0x4] sm:$0xf]
    %v566 = vld [vmem:[%s5 + $0x8] sm:$0xf]
    %v567 = vld [vmem:[%s5 + $0xc] sm:$0xf]
    %v568 = vld [vmem:[%s5 + $0x10] sm:$0xf]
    %v569 = vld [vmem:[%s5 + $0x14] sm:$0xf]
    %v570 = vld [vmem:[%s5 + $0x18] sm:$0xf]
    %v571 = vld [vmem:[%s5 + $0x1c] sm:$0xf]
    %v572 = vld [vmem:[%s5 + $0x20] sm:$0xf]
    %v573 = vld [vmem:[%s5 + $0x24] sm:$0xf]
    %v574 = vld [vmem:[%s5 + $0x28] sm:$0xf]
    %v575 = vld [vmem:[%s5 + $0x2c] sm:$0xf]
    %v576 = vld [vmem:[%s5 + $0x30] sm:$0xf]
    %v577 = vld [vmem:[%s5 + $0x34] sm:$0xf]
    %v578 = vld [vmem:[%s5 + $0x38] sm:$0xf]
    %v579 = vld [vmem:[%s5 + $0x3c] sm:$0xf]
    %v580 = vld [vmem:[%s6] sm:$0x1]
    %v582 = vlaneseq
    %v583 = vshrl.u32 %v582, 7
    %v584 = vsub.s32 0, %v583
    %v585 = vrot.slane %v580, %v584
    %v603 = vunpack.c.l.b16 %v564
    %v604 = vunpack.c.l.b16 %v565
    %v605 = vunpack.c.l.b16 %v566
    %v606 = vunpack.c.l.b16 %v567
    %v607 = vunpack.c.l.b16 %v568
    %v608 = vunpack.c.l.b16 %v569
    %v609 = vunpack.c.l.b16 %v570
    %v610 = vunpack.c.l.b16 %v571
    %v611 = vunpack.c.l.b16 %v572
    %v612 = vunpack.c.l.b16 %v573
    %v613 = vunpack.c.l.b16 %v574
    %v614 = vunpack.c.l.b16 %v575
    %v615 = vunpack.c.l.b16 %v576
    %v616 = vunpack.c.l.b16 %v577
    %v617 = vunpack.c.l.b16 %v578
    %v618 = vunpack.c.l.b16 %v579
    %v619 = vpack.c.b16 %v604, %v603
    %v620 = vpack.c.b16 %v606, %v605
    %v621 = vpack.c.b16 %v608, %v607
    %v622 = vpack.c.b16 %v610, %v609
    %v623 = vpack.c.b16 %v612, %v611
    %v624 = vpack.c.b16 %v614, %v613
    %v625 = vpack.c.b16 %v616, %v615
    %v626 = vpack.c.b16 %v618, %v617
    %635 = vmatprep.subr.bf16.mxu0 0
    %636 = vmatpush1.bf16.msra.mxu0 %v619
    %637 = vmatprep.subr.bf16.mxu0 0
    %638 = vmatpush1.bf16.msra.mxu0 %v620
    %639 = vmatprep.subr.bf16.mxu0 0
    %640 = vmatpush1.bf16.msra.mxu0 %v621
    %641 = vmatprep.subr.bf16.mxu0 0
    %642 = vmatpush1.bf16.msra.mxu0 %v622
    %643 = vmatprep.subr.bf16.mxu0 0
    %644 = vmatpush1.bf16.msra.mxu0 %v623
    %645 = vmatprep.subr.bf16.mxu0 0
    %646 = vmatpush1.bf16.msra.mxu0 %v624
    %647 = vmatprep.subr.bf16.mxu0 0
    %648 = vmatpush1.bf16.msra.mxu0 %v625
    %649 = vmatprep.subr.bf16.mxu0 0
    %650 = vmatpush1.bf16.msra.mxu0 %v626
    %651 = vmatprep.subr.bf16.mxu0 0
    %652 = vmatpush1.bf16.msra.mxu0 0
    %653 = vmatprep.subr.bf16.mxu0 0
    %654 = vmatpush1.bf16.msra.mxu0 0
    %655 = vmatprep.subr.bf16.mxu0 0
    %656 = vmatpush1.bf16.msra.mxu0 0
    %657 = vmatprep.subr.bf16.mxu0 0
    %658 = vmatpush1.bf16.msra.mxu0 0
    %659 = vmatprep.subr.bf16.mxu0 0
    %660 = vmatpush1.bf16.msra.mxu0 0
    %661 = vmatprep.subr.bf16.mxu0 0
    %662 = vmatpush1.bf16.msra.mxu0 0
    %663 = vmatprep.subr.bf16.mxu0 0
    %664 = vmatpush1.bf16.msra.mxu0 0
    %665 = vmatprep.subr.bf16.mxu0 0
    %666 = vmatpush1.bf16.msra.mxu0 0
    %667 = vmatprep.mubr.bf16.mxu0 0
    %668 = vmatmul.mubr.bf16.gmra.mrb[0].mxu0 %v563
    %v669 = vpop.f32.mrb[0].mxu0
    %v670 = vadd.f32 %v585, %v669
    %v671 = vpop.f32.mrb[0].mxu0
    %v672 = vpop.f32.mrb[0].mxu0
    %v673 = vpop.f32.mrb[0].mxu0
    %674 = vdwg.mxu0
    %675 = vst [vmem:[#allocation5] sm:$0xff] %v670
    // Predicated region
    $region34: #{rnn_forward.1} parent=1 // pred_check
      _
    $region35: #{rnn_forward.1} parent=1 // pred_check_branch
      %677 = sbr.rel (0) target = $region37
    $region36: #{rnn_forward.1} parent=1 // pred_region
      %s679 = ssub.s32 128, 128
      %680 = vsyncadd [#allocation4], %s679
      %s682 = sshll.u32 [#allocation5], 4
      %s683 = int_to_ptr.vmem [resolvable:$true] %s682
      %685 = dma.vmem_to_hbm [thread:$0]  %s683, 128, %s7, [#allocation4]
    $region37: #{rnn_forward.1} parent=1 // pred_fallthru
      _
    // Predicated region
    $region38: #{rnn_forward.1} parent=1 // pred_check
      _
    $region39: #{rnn_forward.1} parent=1 // pred_check_branch
      %687 = sbr.rel (0) target = $region41
    $region40: #{rnn_forward.1} parent=1 // pred_region
      _
    $region41: #{rnn_forward.1} parent=1 // pred_fallthru
      _
    // Predicated region
    $region42: #{rnn_forward.1} parent=1 // pred_check
      _
    $region43: #{rnn_forward.1} parent=1 // pred_check_branch
      %689 = sbr.rel (0) target = $region45
    $region44: #{rnn_forward.1} parent=1 // pred_region
      _
    $region45: #{rnn_forward.1} parent=1 // pred_fallthru
      _
    // Predicated region
    $region46: #{rnn_forward.1} parent=1 // pred_check
      _
    $region47: #{rnn_forward.1} parent=1 // pred_check_branch
      %691 = sbr.rel (0) target = $region49
    $region48: #{rnn_forward.1} parent=1 // pred_region
      %692 = dma.done [#allocation4], 128
    $region49: #{rnn_forward.1} parent=1 // pred_fallthru
      _
    // Predicated region
    $region50: #{rnn_forward.1} parent=1 // pred_check
      _
    $region51: #{rnn_forward.1} parent=1 // pred_check_branch
      %694 = sbr.rel (0) target = $region53
    $region52: #{rnn_forward.1} parent=1 // pred_region
      _
    $region53: #{rnn_forward.1} parent=1 // pred_fallthru
      _
    // Predicated region
    $region54: #{rnn_forward.1} parent=1 // pred_check
      _
    $region55: #{rnn_forward.1} parent=1 // pred_check_branch
      %696 = sbr.rel (0) target = $region57
    $region56: #{rnn_forward.1} parent=1 // pred_region
      _
    $region57: #{rnn_forward.1} parent=1 // pred_fallthru
      _
    %697 = vsyncpa [#allocation3], 1
    %698 = vsyncpa [#allocation4], 1

</llo_original>
